<compile_context>
chip_gen: v7x
topology: tpu7x:2x2x1
jax: 0.10.0
libtpu: 0.0.40
codegen_flags: <defaults>
</compile_context>

<pallas_src>
import math

import jax
import jax.numpy as jnp
from jax.experimental import pallas as pl
from jax.experimental.pallas import tpu as pltpu

# ---------------- configuration (small, deterministic) ----------------
K = 4                  # number of classes / binary GLN models
N = 8                  # batch size
D = 16                 # input feature dim
LAYERS = [32, 16, 1]   # neurons per gated layer (last layer = 1 -> one prob/class)
C = 2                  # halfspaces per neuron
S = 2 ** C             # contexts per neuron
EPS = 0.01             # GLN probability clipping

L_HI = math.log((1.0 - EPS) / EPS)   # logit(1 - EPS)
L_LO = -L_HI                         # logit(EPS)

KJ = [K * j for j in LAYERS]         # class-stacked neurons per layer: [128, 64, 4]

# ---------------- packed-slab layout (all params in one operand) ----------------
P = 128                              # padded lane-group width per gate bit / per context
NUM_L = len(LAYERS)
ROWS_A = 24                          # D hyperplane rows + 1 (-bias) row, padded 17 -> 24
GATE_COLS = C * P * NUM_L            # 768 gate columns (layer-major, bit-major, 128-padded)
W1_COLS = S * P                      # 512 layer-1 mixing columns (context-major)
SLAB_COLS = GATE_COLS + W1_COLS      # 1280 (multiple of 128)
SLAB_ROWS = ROWS_A + P               # 152  (w2 and w3 share the lower 128-row block)
W3_COL0 = S * P                      # w3 starts at col 512 inside the lower row block
# slab size: 152 * 1280 * 4 B ~= 0.78 MB  (trivial vs VMEM on v5e/v6e/v7x)


def _stable_sigmoid(o):
    # numerically stable sigmoid: avoids exp(-o) overflow for large negative o
    e = jnp.exp(-jnp.abs(o))
    return jnp.where(o >= 0.0, 1.0 / (1.0 + e), e / (1.0 + e))


# ---------------- Pallas kernel: one invocation, all classes fused ----------------
def _select4(g2p, a4p):
    """4-way context select.  g2p: [N, 2P] gate functions (>0 = bit set); a4p: [N, 4P]."""
    b0 = g2p[:, 0:P] > 0.0
    b1 = g2p[:, P:2 * P] > 0.0
    # context index = b0 + 2*b1 ; all slices are 128-lane aligned whole-vreg ops
    return jnp.where(
        b1,
        jnp.where(b0, a4p[:, 3 * P:4 * P], a4p[:, 2 * P:3 * P]),
        jnp.where(b0, a4p[:, 1 * P:2 * P], a4p[:, 0 * P:1 * P]))


def one_vs_all_kernel(x_ref, p_ref, out_ref):
    x = x_ref[...]                                   # [N, D] f32
    z0 = jnp.clip(x, L_LO, L_HI)                     # base predictions (logit domain)

    # ---- fused gate + layer-1 mixing matmul ----
    # LHS rows 0:N   = [x  | 1 | 0...]  -> gate functions (bias folded via the -b row)
    # LHS rows N:2N  = [z0 | 0 | 0...]  -> layer-1 mixing inputs
    xz = jnp.concatenate([x, z0], axis=0)            # [2N, D]
    col = jax.lax.broadcasted_iota(jnp.int32, (2 * N, ROWS_A - D), 1)
    row = jax.lax.broadcasted_iota(jnp.int32, (2 * N, ROWS_A - D), 0)
    tail = jnp.where(jnp.logical_and(col == 0, row < N), 1.0, 0.0)   # [2N, 8]
    lhs = jnp.concatenate([xz, tail], axis=1)        # [2N, 24]

    r0 = jnp.dot(lhs, p_ref[0:ROWS_A, :],
                 preferred_element_type=jnp.float32)                 # [2N, 1280]
    gf = r0[0:N, 0:GATE_COLS]                        # [N, 768]  gate funcs (x@h - b)
    a1 = r0[N:2 * N, GATE_COLS:SLAB_COLS]            # [N, 512]  layer-1 pre-acts per ctx

    # ---- layer 1 ----
    z = jnp.clip(_select4(gf[:, 0:2 * P], a1), L_LO, L_HI)           # [N, 128]
    # ---- layer 2 ----
    a2 = jnp.dot(z, p_ref[ROWS_A:SLAB_ROWS, 0:S * P],
                 preferred_element_type=jnp.float32)                 # [N, 512]
    z = jnp.clip(_select4(gf[:, 2 * P:4 * P], a2), L_LO, L_HI)       # [N, 128] (cols>=64 are 0)
    # ---- layer 3 ----
    a3 = jnp.dot(z, p_ref[ROWS_A:SLAB_ROWS, W3_COL0:W3_COL0 + S * P],
                 preferred_element_type=jnp.float32)                 # [N, 512]
    o = _select4(gf[:, 4 * P:6 * P], a3)                             # [N, 128] (cols>=K are 0)

    # single sigmoid at the very end; lane-dense [N, K] store
    out_ref[...] = jnp.clip(_stable_sigmoid(o[:, 0:K]), EPS, 1.0 - EPS)


@jax.jit
def one_vs_all_forward(x, slab):
    """x: [N, D]; slab: packed parameter slab (see pack_params). Returns [N, K] probs."""
    return pl.pallas_call(
        one_vs_all_kernel,
        out_shape=jax.ShapeDtypeStruct((N, K), jnp.float32),
        in_specs=[pl.BlockSpec(memory_space=pltpu.MemorySpace.VMEM),
                  pl.BlockSpec(memory_space=pltpu.MemorySpace.VMEM)],
        out_specs=pl.BlockSpec(memory_space=pltpu.MemorySpace.VMEM),
        cost_estimate=pl.CostEstimate(
            flops=3_100_000, transcendentals=N * K, bytes_accessed=790_000),
    )(x, slab)


# ---------------- parameter packing (host side, once) ----------------
def pack_params(params):
    """params: list over layers of (hyp [K,D,C,J], bias [K,C,J], w [K,P_in,S,J]).

    Packs everything into one f32 slab [SLAB_ROWS, SLAB_COLS]:
      rows 0:D        cols (2l+c)*P .. +K*J   : gate hyperplanes (layer l, bit c)
      row  D          same columns            : -bias (folded into the gate matmul)
      rows 0:D        cols GATE_COLS + s*P .. : layer-1 mixing weights (context s)
      rows 24:24+128  cols 0 .. / 512 ..      : layer-2 / layer-3 block-diag mixing weights
    All unused (padding) entries are zero.
    """
    slab = jnp.zeros((SLAB_ROWS, SLAB_COLS), jnp.float32)

    # gate block: column within a (layer, bit) group = k*J + j, zero-padded to 128 lanes
    for l, (hyp, bias, _w) in enumerate(params):
        j = hyp.shape[-1]
        kj = K * j
        h = jnp.transpose(hyp, (1, 2, 0, 3)).reshape(D, C, kj)   # [D, C, K*J]
        b = jnp.transpose(bias, (1, 0, 2)).reshape(C, kj)        # [C, K*J]
        for c in range(C):
            col0 = (C * l + c) * P
            slab = slab.at[0:D, col0:col0 + kj].set(h[:, c, :])
            slab = slab.at[D, col0:col0 + kj].set(-b[c, :])

    # layer 1: z0 is class-independent -> dense [D, S, K*J1]; K*J1 == 128 exactly
    w1 = params[0][2]                                            # [K, D, S, J1]
    w1t = jnp.transpose(w1, (1, 2, 0, 3)).reshape(D, S, KJ[0])   # [D, S, 128]
    for c in range(S):
        col0 = GATE_COLS + c * P
        slab = slab.at[0:D, col0:col0 + KJ[0]].set(w1t[:, c, :])

    # layers 2/3: per-class inputs -> block-diagonal over classes, zero-padded to 128 lanes
    def place_blockdiag(slab, w, col_base):
        kk, p_in, ss, j = w.shape                                # [K, prev_J, S, J]
        eye = jnp.eye(kk, dtype=w.dtype)
        for c in range(ss):
            blk = jnp.einsum('kpj,kq->kpqj', w[:, :, c, :], eye)  # [K, P_in, K', J]
            bd = blk.reshape(kk * p_in, kk * j)                    # rows k*P_in+p, cols k'*J+j
            col0 = col_base + c * P
            slab = slab.at[ROWS_A:ROWS_A + kk * p_in, col0:col0 + kk * j].set(bd)
        return slab

    slab = place_blockdiag(slab, params[1][2], 0)        # w2: rows 24:152, cols   0:512 (real 64/ctx)
    slab = place_blockdiag(slab, params[2][2], W3_COL0)  # w3: rows 24:88,  cols 512:1024 (real 4/ctx)
    return slab


# ---------------- pure-JAX reference (per-class, same math) ----------------
def reference_forward(x, params):
    outs = []
    for k in range(K):
        z = jnp.clip(x, L_LO, L_HI)                  # base predictions (logit domain)
        o = None
        for (hyp, bias, w) in params:
            g = (jnp.einsum('nd,dcj->ncj', x, hyp[k]) - bias[k][None]) > 0.0    # [N, C, J]
            ctx = g[:, 0, :].astype(jnp.int32) + 2 * g[:, 1, :].astype(jnp.int32)
            a = jnp.einsum('np,psj->nsj', z, w[k])                              # [N, S, J]
            o = jnp.take_along_axis(a, ctx[:, None, :], axis=1)[:, 0, :]        # [N, J]
            z = jnp.clip(o, L_LO, L_HI)
        outs.append(jnp.clip(_stable_sigmoid(o), EPS, 1.0 - EPS))               # [N, 1]
    return jnp.concatenate(outs, axis=-1)            # [N, K]


# ---------------- deterministic parameter init ----------------
def init_params(key):
    params = []
    prev = D
    for j in LAYERS:
        key, k1, k2, k3 = jax.random.split(key, 4)
        hyp = jax.random.normal(k1, (K, D, C, j), jnp.float32)
        bias = 0.1 * jax.random.normal(k2, (K, C, j), jnp.float32)
        # GLN-style init: uniform mixture 1/P plus a tiny deterministic perturbation
        w = (jnp.full((K, prev, S, j), 1.0 / prev, jnp.float32)
             + 0.01 * jax.random.normal(k3, (K, prev, S, j), jnp.float32))
        params.append((hyp, bias, w))
        prev = j
    return params


if __name__ == "__main__":
    key = jax.random.PRNGKey(0)
    key, kx, kp = jax.random.split(key, 3)
    x = jax.random.normal(kx, (N, D), jnp.float32)
    params = init_params(kp)
    slab = pack_params(params)

    out = jax.block_until_ready(one_vs_all_forward(x, slab))
    ref = jax.block_until_ready(reference_forward(x, params))

    assert out.shape == (N, K), out.shape
    # Note: gate bits are a hard threshold; MXU vs einsum rounding could in principle
    # flip a context for samples with x.h ~= bias, but for this fixed seed the minimum
    # gate margin is orders of magnitude above f32 rounding noise.
    assert jnp.allclose(out, ref, atol=1e-5, rtol=1e-5), (out, ref)
    print("KERNEL_OK")
</pallas_src>

<mosaic_0001>
module attributes {stable_mosaic.version = 11 : i64} {
  func.func @one_vs_all_kernel(%arg0: memref<8x16xf32, #tpu.memory_space<vmem>>, %arg1: memref<152x1280xf32, #tpu.memory_space<vmem>>, %arg2: memref<8x4xf32, #tpu.memory_space<vmem>>) attributes {dimension_semantics = [], scalar_prefetch = 0 : i64, scratch_operands = 0 : i64, tpu.core_type = #tpu.core_type<tc>} {
    %c0 = arith.constant 0 : index
    %c0_0 = arith.constant 0 : index
    %0 = vector.load %arg0[%c0, %c0_0] : memref<8x16xf32, #tpu.memory_space<vmem>>, vector<8x16xf32>
    %cst = arith.constant -4.595120e+00 : f32
    %cst_1 = arith.constant 4.595120e+00 : f32
    %1 = vector.broadcast %cst : f32 to vector<8x16xf32>
    %2 = arith.maximumf %1, %0 : vector<8x16xf32>
    %3 = vector.broadcast %cst_1 : f32 to vector<8x16xf32>
    %4 = arith.minimumf %3, %2 : vector<8x16xf32>
    %5 = tpu.concatenate %0, %4 in 0 : vector<8x16xf32>, vector<8x16xf32> -> vector<16x16xf32>
    %6 = tpu.iota {dimensions = array<i32: 1>} : vector<16x8xi32>
    %7 = tpu.iota {dimensions = array<i32: 0>} : vector<16x8xi32>
    %c0_i32 = arith.constant 0 : i32
    %8 = vector.broadcast %c0_i32 : i32 to vector<16x8xi32>
    %9 = arith.cmpi eq, %6, %8 : vector<16x8xi32>
    %c8_i32 = arith.constant 8 : i32
    %10 = vector.broadcast %c8_i32 : i32 to vector<16x8xi32>
    %11 = arith.cmpi slt, %7, %10 : vector<16x8xi32>
    %12 = arith.andi %9, %11 : vector<16x8xi1>
    %cst_2 = arith.constant 1.000000e+00 : f32
    %cst_3 = arith.constant 0.000000e+00 : f32
    %13 = vector.broadcast %cst_2 : f32 to vector<16x8xf32>
    %14 = vector.broadcast %cst_3 : f32 to vector<16x8xf32>
    %15 = arith.select %12, %13, %14 : vector<16x8xi1>, vector<16x8xf32>
    %16 = tpu.concatenate %5, %15 in 1 : vector<16x16xf32>, vector<16x8xf32> -> vector<16x24xf32>
    %c0_4 = arith.constant 0 : index
    %c0_5 = arith.constant 0 : index
    %17 = vector.load %arg1[%c0_4, %c0_5] : memref<152x1280xf32, #tpu.memory_space<vmem>>, vector<24x1280xf32>
    %cst_6 = arith.constant dense<0.000000e+00> : vector<16x1280xf32>
    %18 = tpu.matmul %16, %17, %cst_6 {dimension_numbers = #tpu.dot_dimension_numbers<[1], [0], [0], [1], [0, 0, 1, 1], [], []>} : vector<16x24xf32>, vector<24x1280xf32>, vector<16x1280xf32> -> vector<16x1280xf32>
    %19 = vector.extract_strided_slice %18 {offsets = [0, 0], sizes = [8, 768], strides = [1, 1]} : vector<16x1280xf32> to vector<8x768xf32>
    %20 = vector.extract_strided_slice %18 {offsets = [8, 768], sizes = [8, 512], strides = [1, 1]} : vector<16x1280xf32> to vector<8x512xf32>
    %21 = vector.extract_strided_slice %19 {offsets = [0, 0], sizes = [8, 256], strides = [1, 1]} : vector<8x768xf32> to vector<8x256xf32>
    %22 = vector.extract_strided_slice %21 {offsets = [0, 0], sizes = [8, 128], strides = [1, 1]} : vector<8x256xf32> to vector<8x128xf32>
    %cst_7 = arith.constant 0.000000e+00 : f32
    %23 = vector.broadcast %cst_7 : f32 to vector<8x128xf32>
    %24 = arith.cmpf ogt, %22, %23 : vector<8x128xf32>
    %25 = vector.extract_strided_slice %21 {offsets = [0, 128], sizes = [8, 128], strides = [1, 1]} : vector<8x256xf32> to vector<8x128xf32>
    %cst_8 = arith.constant 0.000000e+00 : f32
    %26 = vector.broadcast %cst_8 : f32 to vector<8x128xf32>
    %27 = arith.cmpf ogt, %25, %26 : vector<8x128xf32>
    %28 = vector.extract_strided_slice %20 {offsets = [0, 384], sizes = [8, 128], strides = [1, 1]} : vector<8x512xf32> to vector<8x128xf32>
    %29 = vector.extract_strided_slice %20 {offsets = [0, 256], sizes = [8, 128], strides = [1, 1]} : vector<8x512xf32> to vector<8x128xf32>
    %30 = arith.select %24, %28, %29 : vector<8x128xi1>, vector<8x128xf32>
    %31 = vector.extract_strided_slice %20 {offsets = [0, 128], sizes = [8, 128], strides = [1, 1]} : vector<8x512xf32> to vector<8x128xf32>
    %32 = vector.extract_strided_slice %20 {offsets = [0, 0], sizes = [8, 128], strides = [1, 1]} : vector<8x512xf32> to vector<8x128xf32>
    %33 = arith.select %24, %31, %32 : vector<8x128xi1>, vector<8x128xf32>
    %34 = arith.select %27, %30, %33 : vector<8x128xi1>, vector<8x128xf32>
    %cst_9 = arith.constant -4.595120e+00 : f32
    %cst_10 = arith.constant 4.595120e+00 : f32
    %35 = vector.broadcast %cst_9 : f32 to vector<8x128xf32>
    %36 = arith.maximumf %35, %34 : vector<8x128xf32>
    %37 = vector.broadcast %cst_10 : f32 to vector<8x128xf32>
    %38 = arith.minimumf %37, %36 : vector<8x128xf32>
    %c24 = arith.constant 24 : index
    %c0_11 = arith.constant 0 : index
    %39 = vector.load %arg1[%c24, %c0_11] : memref<152x1280xf32, #tpu.memory_space<vmem>>, vector<128x512xf32>
    %cst_12 = arith.constant dense<0.000000e+00> : vector<8x512xf32>
    %40 = tpu.matmul %38, %39, %cst_12 {dimension_numbers = #tpu.dot_dimension_numbers<[1], [0], [0], [1], [0, 0, 1, 1], [], []>} : vector<8x128xf32>, vector<128x512xf32>, vector<8x512xf32> -> vector<8x512xf32>
    %41 = vector.extract_strided_slice %19 {offsets = [0, 256], sizes = [8, 256], strides = [1, 1]} : vector<8x768xf32> to vector<8x256xf32>
    %42 = vector.extract_strided_slice %41 {offsets = [0, 0], sizes = [8, 128], strides = [1, 1]} : vector<8x256xf32> to vector<8x128xf32>
    %cst_13 = arith.constant 0.000000e+00 : f32
    %43 = vector.broadcast %cst_13 : f32 to vector<8x128xf32>
    %44 = arith.cmpf ogt, %42, %43 : vector<8x128xf32>
    %45 = vector.extract_strided_slice %41 {offsets = [0, 128], sizes = [8, 128], strides = [1, 1]} : vector<8x256xf32> to vector<8x128xf32>
    %cst_14 = arith.constant 0.000000e+00 : f32
    %46 = vector.broadcast %cst_14 : f32 to vector<8x128xf32>
    %47 = arith.cmpf ogt, %45, %46 : vector<8x128xf32>
    %48 = vector.extract_strided_slice %40 {offsets = [0, 384], sizes = [8, 128], strides = [1, 1]} : vector<8x512xf32> to vector<8x128xf32>
    %49 = vector.extract_strided_slice %40 {offsets = [0, 256], sizes = [8, 128], strides = [1, 1]} : vector<8x512xf32> to vector<8x128xf32>
    %50 = arith.select %44, %48, %49 : vector<8x128xi1>, vector<8x128xf32>
    %51 = vector.extract_strided_slice %40 {offsets = [0, 128], sizes = [8, 128], strides = [1, 1]} : vector<8x512xf32> to vector<8x128xf32>
    %52 = vector.extract_strided_slice %40 {offsets = [0, 0], sizes = [8, 128], strides = [1, 1]} : vector<8x512xf32> to vector<8x128xf32>
    %53 = arith.select %44, %51, %52 : vector<8x128xi1>, vector<8x128xf32>
    %54 = arith.select %47, %50, %53 : vector<8x128xi1>, vector<8x128xf32>
    %cst_15 = arith.constant -4.595120e+00 : f32
    %cst_16 = arith.constant 4.595120e+00 : f32
    %55 = vector.broadcast %cst_15 : f32 to vector<8x128xf32>
    %56 = arith.maximumf %55, %54 : vector<8x128xf32>
    %57 = vector.broadcast %cst_16 : f32 to vector<8x128xf32>
    %58 = arith.minimumf %57, %56 : vector<8x128xf32>
    %c24_17 = arith.constant 24 : index
    %c512 = arith.constant 512 : index
    %59 = vector.load %arg1[%c24_17, %c512] : memref<152x1280xf32, #tpu.memory_space<vmem>>, vector<128x512xf32>
    %cst_18 = arith.constant dense<0.000000e+00> : vector<8x512xf32>
    %60 = tpu.matmul %58, %59, %cst_18 {dimension_numbers = #tpu.dot_dimension_numbers<[1], [0], [0], [1], [0, 0, 1, 1], [], []>} : vector<8x128xf32>, vector<128x512xf32>, vector<8x512xf32> -> vector<8x512xf32>
    %61 = vector.extract_strided_slice %19 {offsets = [0, 512], sizes = [8, 256], strides = [1, 1]} : vector<8x768xf32> to vector<8x256xf32>
    %62 = vector.extract_strided_slice %61 {offsets = [0, 0], sizes = [8, 128], strides = [1, 1]} : vector<8x256xf32> to vector<8x128xf32>
    %cst_19 = arith.constant 0.000000e+00 : f32
    %63 = vector.broadcast %cst_19 : f32 to vector<8x128xf32>
    %64 = arith.cmpf ogt, %62, %63 : vector<8x128xf32>
    %65 = vector.extract_strided_slice %61 {offsets = [0, 128], sizes = [8, 128], strides = [1, 1]} : vector<8x256xf32> to vector<8x128xf32>
    %cst_20 = arith.constant 0.000000e+00 : f32
    %66 = vector.broadcast %cst_20 : f32 to vector<8x128xf32>
    %67 = arith.cmpf ogt, %65, %66 : vector<8x128xf32>
    %68 = vector.extract_strided_slice %60 {offsets = [0, 384], sizes = [8, 128], strides = [1, 1]} : vector<8x512xf32> to vector<8x128xf32>
    %69 = vector.extract_strided_slice %60 {offsets = [0, 256], sizes = [8, 128], strides = [1, 1]} : vector<8x512xf32> to vector<8x128xf32>
    %70 = arith.select %64, %68, %69 : vector<8x128xi1>, vector<8x128xf32>
    %71 = vector.extract_strided_slice %60 {offsets = [0, 128], sizes = [8, 128], strides = [1, 1]} : vector<8x512xf32> to vector<8x128xf32>
    %72 = vector.extract_strided_slice %60 {offsets = [0, 0], sizes = [8, 128], strides = [1, 1]} : vector<8x512xf32> to vector<8x128xf32>
    %73 = arith.select %64, %71, %72 : vector<8x128xi1>, vector<8x128xf32>
    %74 = arith.select %67, %70, %73 : vector<8x128xi1>, vector<8x128xf32>
    %75 = vector.extract_strided_slice %74 {offsets = [0, 0], sizes = [8, 4], strides = [1, 1]} : vector<8x128xf32> to vector<8x4xf32>
    %76 = math.absf %75 : vector<8x4xf32>
    %cst_21 = arith.constant 0.000000e+00 : f32
    %77 = vector.broadcast %cst_21 : f32 to vector<8x4xf32>
    %78 = arith.subf %77, %76 : vector<8x4xf32>
    %79 = math.exp %78 : vector<8x4xf32>
    %cst_22 = arith.constant 0.000000e+00 : f32
    %80 = vector.broadcast %cst_22 : f32 to vector<8x4xf32>
    %81 = arith.cmpf oge, %75, %80 : vector<8x4xf32>
    %cst_23 = arith.constant 1.000000e+00 : f32
    %82 = vector.broadcast %cst_23 : f32 to vector<8x4xf32>
    %83 = arith.addf %82, %79 : vector<8x4xf32>
    %cst_24 = arith.constant 1.000000e+00 : f32
    %84 = vector.broadcast %cst_24 : f32 to vector<8x4xf32>
    %85 = arith.divf %84, %83 : vector<8x4xf32>
    %cst_25 = arith.constant 1.000000e+00 : f32
    %86 = vector.broadcast %cst_25 : f32 to vector<8x4xf32>
    %87 = arith.addf %86, %79 : vector<8x4xf32>
    %88 = arith.divf %79, %87 : vector<8x4xf32>
    %89 = arith.select %81, %85, %88 : vector<8x4xi1>, vector<8x4xf32>
    %cst_26 = arith.constant 0.00999999977 : f32
    %cst_27 = arith.constant 9.900000e-01 : f32
    %90 = vector.broadcast %cst_26 : f32 to vector<8x4xf32>
    %91 = arith.maximumf %90, %89 : vector<8x4xf32>
    %92 = vector.broadcast %cst_27 : f32 to vector<8x4xf32>
    %93 = arith.minimumf %92, %91 : vector<8x4xf32>
    %c0_28 = arith.constant 0 : index
    %c0_29 = arith.constant 0 : index
    %94 = vector.load %arg2[%c0_28, %c0_29] : memref<8x4xf32, #tpu.memory_space<vmem>>, vector<8x4xf32>
    tpu.vector_store %arg2[%c0_28, %c0_29], %93 {strides = array<i32>} : memref<8x4xf32, #tpu.memory_space<vmem>>, vector<8x4xf32>,
    return
  }
}

</mosaic_0001>

<llo_original>
// kernel: one_vs_all_forward.1
$region0: #{one_vs_all_forward.1}
  #allocation0 [shape = 'u32[]', space=smem, size = 0x4, offset = 0x4, fixed_abs, tag = 'smem constant byte address 0x4 - core index']
  #allocation1 [shape = 'u32[144,128]{1,0:T(1,128)}', space=vmem, size = 0x12000, scoped, tag = 'internal scratch']
  %s0 = inlined_call_operand.hbm [shape: f32[8,16], index: 0, kind: input, shape index: {}]
  %s1 = inlined_call_operand.hbm [shape: f32[152,1280], index: 1, kind: input, shape index: {}]
  %s2 = inlined_call_operand.vmem [shape: f32[8,4], index: 2, kind: output, shape index: {}]
  %s3 = sld [smem:[#allocation0]]
  $region26: #{one_vs_all_forward.1} parent=0
    _
  %s5 = ssub.s32 1, %s3
  %s6 = scalar_select 0, %s5, %s3
  $region1: #{one_vs_all_forward.1} parent=0
    #allocation2 [shape = 'u8[4096]{0}', space=vmem, size = 0x1000, scoped, tag = 'input window, operand 0, single buffered']
    #allocation3 [shape = 's32[1]{0}', space=sflag, size = 0x4, scoped, tag = 'scoped memory for one_vs_all_forward.1']
    #allocation4 [shape = 'u8[778240]{0}', space=vmem, size = 0xbe000, scoped, tag = 'input window, operand 1, single buffered']
    #allocation5 [shape = 's32[1]{0}', space=sflag, size = 0x4, scoped, tag = 'scoped memory for one_vs_all_forward.1']
    %7 = vsyncpa [#allocation3], 0
    %8 = vsyncpa [#allocation5], 0
    // Predicated region
    $region2: #{one_vs_all_forward.1} parent=1 // pred_check
      _
    $region3: #{one_vs_all_forward.1} parent=1 // pred_check_branch
      %10 = sbr.rel (0) target = $region5
    $region4: #{one_vs_all_forward.1} parent=1 // pred_region
      %s12 = ssub.s32 128, 128
      %13 = vsyncadd [#allocation3], %s12
      %s15 = sshll.u32 [#allocation2], 4
      %s16 = int_to_ptr.vmem [resolvable:$true] %s15
      %18 = dma.hbm_to_vmem [thread:$0]  %s0, 128, %s16, [#allocation3]
    $region5: #{one_vs_all_forward.1} parent=1 // pred_fallthru
      _
    // Predicated region
    $region6: #{one_vs_all_forward.1} parent=1 // pred_check
      _
    $region7: #{one_vs_all_forward.1} parent=1 // pred_check_branch
      %20 = sbr.rel (0) target = $region9
    $region8: #{one_vs_all_forward.1} parent=1 // pred_region
      %s22 = ssub.s32 24320, 24320
      %23 = vsyncadd [#allocation5], %s22
      %s24 = sshll.u32 [#allocation4], 4
      %s25 = int_to_ptr.vmem [resolvable:$true] %s24
      %30 = dma.hbm_to_vmem [thread:$0]  %s1, 24320, %s25, [#allocation5], 1280, 1280, 80
    $region9: #{one_vs_all_forward.1} parent=1 // pred_fallthru
      _
    // Predicated region
    $region10: #{one_vs_all_forward.1} parent=1 // pred_check
      _
    $region11: #{one_vs_all_forward.1} parent=1 // pred_check_branch
      %32 = sbr.rel (0) target = $region13
    $region12: #{one_vs_all_forward.1} parent=1 // pred_region
      %33 = dma.done [#allocation3], 128
    $region13: #{one_vs_all_forward.1} parent=1 // pred_fallthru
      _
    // Predicated region
    $region14: #{one_vs_all_forward.1} parent=1 // pred_check
      _
    $region15: #{one_vs_all_forward.1} parent=1 // pred_check_branch
      %35 = sbr.rel (0) target = $region17
    $region16: #{one_vs_all_forward.1} parent=1 // pred_region
      %36 = dma.done [#allocation5], 24320
    $region17: #{one_vs_all_forward.1} parent=1 // pred_fallthru
      _
    %v37 = vld [vmem:[#allocation2] sm:$0xff]
    %v38 = vmax.f32 %v37, -4.59512
    %v39 = vmin.f32 %v38, 4.59512
    %v40 = vlaneseq
    %v41 = vand.u32 %v40, 127
    %v42 = vlaneseq
    %v43 = vshrl.u32 %v42, 7
    %v44 = vadd.s32 %v43, 8
    %vm45 = vcmp.eq.s32.totalorder %v41, 0
    %vm46 = vcmp.lt.s32.totalorder %v43, 8
    %vm47 = vcmp.lt.s32.totalorder %v44, 8
    %vm48 = vmand %vm45, %vm46
    %vm49 = vmand %vm45, %vm47
    %v50 = vsel %vm48, 1.0, 0.0
    %v51 = vsel %vm49, 1.0, 0.0
    %54 = vrot.lane.b32.xlu0 %v50, 16
    %v55 = vpop.permute.xlu0 %54
    %56 = vrot.lane.b32.xlu0 %v51, 16
    %v57 = vpop.permute.xlu0 %56
    %vm60 = vcmask 130048
    %v61 = vsel %vm60, %v37, %v55
    %v62 = vsel %vm60, %v39, %v57
    %v63 = vld [vmem:[#allocation4] sm:$0xff]
    %v64 = vld [vmem:[#allocation4 + $0x8] sm:$0xff]
    %v65 = vld [vmem:[#allocation4 + $0x10] sm:$0xff]
    %v66 = vld [vmem:[#allocation4 + $0x18] sm:$0xff]
    %v67 = vld [vmem:[#allocation4 + $0x20] sm:$0xff]
    %v68 = vld [vmem:[#allocation4 + $0x28] sm:$0xff]
    %v69 = vld [vmem:[#allocation4 + $0x30] sm:$0xff]
    %v70 = vld [vmem:[#allocation4 + $0x38] sm:$0xff]
    %v71 = vld [vmem:[#allocation4 + $0x40] sm:$0xff]
    %v72 = vld [vmem:[#allocation4 + $0x48] sm:$0xff]
    %v73 = vld [vmem:[#allocation4 + $0x50] sm:$0xff]
    %v74 = vld [vmem:[#allocation4 + $0x58] sm:$0xff]
    %v75 = vld [vmem:[#allocation4 + $0x60] sm:$0xff]
    %v76 = vld [vmem:[#allocation4 + $0x68] sm:$0xff]
    %v77 = vld [vmem:[#allocation4 + $0x70] sm:$0xff]
    %v78 = vld [vmem:[#allocation4 + $0x78] sm:$0xff]
    %v79 = vld [vmem:[#allocation4 + $0x80] sm:$0xff]
    %v80 = vld [vmem:[#allocation4 + $0x88] sm:$0xff]
    %v81 = vld [vmem:[#allocation4 + $0x90] sm:$0xff]
    %v82 = vld [vmem:[#allocation4 + $0x98] sm:$0xff]
    %v83 = vld [vmem:[#allocation4 + $0xa0] sm:$0xff]
    %v84 = vld [vmem:[#allocation4 + $0xa8] sm:$0xff]
    %v85 = vld [vmem:[#allocation4 + $0xb0] sm:$0xff]
    %v86 = vld [vmem:[#allocation4 + $0xb8] sm:$0xff]
    %v87 = vld [vmem:[#allocation4 + $0xc0] sm:$0xff]
    %v88 = vld [vmem:[#allocation4 + $0xc8] sm:$0xff]
    %v89 = vld [vmem:[#allocation4 + $0xd0] sm:$0xff]
    %v90 = vld [vmem:[#allocation4 + $0xd8] sm:$0xff]
    %v91 = vld [vmem:[#allocation4 + $0xe0] sm:$0xff]
    %v92 = vld [vmem:[#allocation4 + $0xe8] sm:$0xff]
    %vm93 = vcmask 195584
    %v95 = vsel %vm93, %v61, 0
    %v98 = vsel %vm93, %v62, 0
    %100 = vmatprep.subr.mxu0 %v64
    %101 = vmatpush1.msra.mxu0 %v63
    %102 = vmatprep.subr.mxu0 %v74
    %103 = vmatpush1.msra.mxu0 %v73
    %104 = vmatprep.subr.mxu0 %v84
    %105 = vmatpush1.msra.mxu0 %v83
    %106 = vmatprep.subr.mxu0 0.0
    %107 = vmatpush1.msra.mxu0 0.0
    %108 = vmatprep.subr.mxu0 0.0
    %109 = vmatpush1.msra.mxu0 0.0
    %110 = vmatprep.subr.mxu0 0.0
    %111 = vmatpush1.msra.mxu0 0.0
    %112 = vmatprep.subr.mxu0 0.0
    %113 = vmatpush1.msra.mxu0 0.0
    %114 = vmatprep.subr.mxu0 0.0
    %115 = vmatpush1.msra.mxu0 0.0
    %116 = vmatprep.subr.mxu0 0.0
    %117 = vmatpush1.msra.mxu0 0.0
    %118 = vmatprep.subr.mxu0 0.0
    %119 = vmatpush1.msra.mxu0 0.0
    %120 = vmatprep.subr.mxu0 0.0
    %121 = vmatpush1.msra.mxu0 0.0
    %122 = vmatprep.subr.mxu0 0.0
    %123 = vmatpush1.msra.mxu0 0.0
    %124 = vmatprep.subr.mxu0 0.0
    %125 = vmatpush1.msra.mxu0 0.0
    %126 = vmatprep.subr.mxu0 0.0
    %127 = vmatpush1.msra.mxu0 0.0
    %128 = vmatprep.subr.mxu0 0.0
    %129 = vmatpush1.msra.mxu0 0.0
    %130 = vmatprep.subr.mxu0 0.0
    %131 = vmatpush1.msra.mxu0 0.0
    %132 = vmatprep.subr.mxu0 0.0
    %133 = vmatpush1.msra.mxu0 0.0
    %134 = vmatprep.subr.mxu0 0.0
    %135 = vmatpush1.msra.mxu0 0.0
    %136 = vmatprep.subr.mxu0 0.0
    %137 = vmatpush1.msra.mxu0 0.0
    %138 = vmatprep.subr.mxu0 0.0
    %139 = vmatpush1.msra.mxu0 0.0
    %140 = vmatprep.subr.mxu0 0.0
    %141 = vmatpush1.msra.mxu0 0.0
    %142 = vmatprep.subr.mxu0 0.0
    %143 = vmatpush1.msra.mxu0 0.0
    %144 = vmatprep.subr.mxu0 0.0
    %145 = vmatpush1.msra.mxu0 0.0
    %146 = vmatprep.subr.mxu0 0.0
    %147 = vmatpush1.msra.mxu0 0.0
    %148 = vmatprep.subr.mxu0 0.0
    %149 = vmatpush1.msra.mxu0 0.0
    %150 = vmatprep.subr.mxu0 0.0
    %151 = vmatpush1.msra.mxu0 0.0
    %152 = vmatprep.subr.mxu0 0.0
    %153 = vmatpush1.msra.mxu0 0.0
    %154 = vmatprep.subr.mxu0 0.0
    %155 = vmatpush1.msra.mxu0 0.0
    %156 = vmatprep.subr.mxu0 0.0
    %157 = vmatpush1.msra.mxu0 0.0
    %158 = vmatprep.subr.mxu0 0.0
    %159 = vmatpush1.msra.mxu0 0.0
    %160 = vmatprep.subr.mxu0 0.0
    %161 = vmatpush1.msra.mxu0 0.0
    %162 = vmatprep.subr.mxu0 0.0
    %163 = vmatpush1.msra.mxu0 0.0
    %164 = vmatprep.mubr.f32.mxu0 0.0
    %165 = vmatmul.mubr.f32.gmra.mrb[0].mxu0 %v95
    %v166 = vpop.f32.mrb[0].mxu0
    %v167 = vadd.f32 0.0, %v166
    %v168 = vpop.f32.mrb[0].mxu0
    %v169 = vadd.f32 0.0, %v168
    %170 = vmatprep.mubr.f32.mxu0 0.0
    %171 = vmatmul.mubr.f32.gmra.mrb[0].mxu0 %v98
    %v172 = vpop.f32.mrb[0].mxu0
    %v173 = vpop.f32.mrb[0].mxu0
    %174 = vdwg.mxu0
    %175 = vmatprep.subr.mxu0 %v66
    %176 = vmatpush1.msra.mxu0 %v65
    %177 = vmatprep.subr.mxu0 %v76
    %178 = vmatpush1.msra.mxu0 %v75
    %179 = vmatprep.subr.mxu0 %v86
    %180 = vmatpush1.msra.mxu0 %v85
    %181 = vmatprep.subr.mxu0 0.0
    %182 = vmatpush1.msra.mxu0 0.0
    %183 = vmatprep.subr.mxu0 0.0
    %184 = vmatpush1.msra.mxu0 0.0
    %185 = vmatprep.subr.mxu0 0.0
    %186 = vmatpush1.msra.mxu0 0.0
    %187 = vmatprep.subr.mxu0 0.0
    %188 = vmatpush1.msra.mxu0 0.0
    %189 = vmatprep.subr.mxu0 0.0
    %190 = vmatpush1.msra.mxu0 0.0
    %191 = vmatprep.subr.mxu0 0.0
    %192 = vmatpush1.msra.mxu0 0.0
    %193 = vmatprep.subr.mxu0 0.0
    %194 = vmatpush1.msra.mxu0 0.0
    %195 = vmatprep.subr.mxu0 0.0
    %196 = vmatpush1.msra.mxu0 0.0
    %197 = vmatprep.subr.mxu0 0.0
    %198 = vmatpush1.msra.mxu0 0.0
    %199 = vmatprep.subr.mxu0 0.0
    %200 = vmatpush1.msra.mxu0 0.0
    %201 = vmatprep.subr.mxu0 0.0
    %202 = vmatpush1.msra.mxu0 0.0
    %203 = vmatprep.subr.mxu0 0.0
    %204 = vmatpush1.msra.mxu0 0.0
    %205 = vmatprep.subr.mxu0 0.0
    %206 = vmatpush1.msra.mxu0 0.0
    %207 = vmatprep.subr.mxu0 0.0
    %208 = vmatpush1.msra.mxu0 0.0
    %209 = vmatprep.subr.mxu0 0.0
    %210 = vmatpush1.msra.mxu0 0.0
    %211 = vmatprep.subr.mxu0 0.0
    %212 = vmatpush1.msra.mxu0 0.0
    %213 = vmatprep.subr.mxu0 0.0
    %214 = vmatpush1.msra.mxu0 0.0
    %215 = vmatprep.subr.mxu0 0.0
    %216 = vmatpush1.msra.mxu0 0.0
    %217 = vmatprep.subr.mxu0 0.0
    %218 = vmatpush1.msra.mxu0 0.0
    %219 = vmatprep.subr.mxu0 0.0
    %220 = vmatpush1.msra.mxu0 0.0
    %221 = vmatprep.subr.mxu0 0.0
    %222 = vmatpush1.msra.mxu0 0.0
    %223 = vmatprep.subr.mxu0 0.0
    %224 = vmatpush1.msra.mxu0 0.0
    %225 = vmatprep.subr.mxu0 0.0
    %226 = vmatpush1.msra.mxu0 0.0
    %227 = vmatprep.subr.mxu0 0.0
    %228 = vmatpush1.msra.mxu0 0.0
    %229 = vmatprep.subr.mxu0 0.0
    %230 = vmatpush1.msra.mxu0 0.0
    %231 = vmatprep.subr.mxu0 0.0
    %232 = vmatpush1.msra.mxu0 0.0
    %233 = vmatprep.subr.mxu0 0.0
    %234 = vmatpush1.msra.mxu0 0.0
    %235 = vmatprep.subr.mxu0 0.0
    %236 = vmatpush1.msra.mxu0 0.0
    %237 = vmatprep.subr.mxu0 0.0
    %238 = vmatpush1.msra.mxu0 0.0
    %239 = vmatprep.mubr.f32.mxu0 0.0
    %240 = vmatmul.mubr.f32.gmra.mrb[0].mxu0 %v95
    %v241 = vpop.f32.mrb[0].mxu0
    %v242 = vadd.f32 0.0, %v241
    %v243 = vpop.f32.mrb[0].mxu0
    %v244 = vadd.f32 0.0, %v243
    %245 = vmatprep.mubr.f32.mxu0 0.0
    %246 = vmatmul.mubr.f32.gmra.mrb[0].mxu0 %v98
    %v247 = vpop.f32.mrb[0].mxu0
    %v248 = vpop.f32.mrb[0].mxu0
    %249 = vdwg.mxu0
    %250 = vmatprep.subr.mxu0 %v68
    %251 = vmatpush1.msra.mxu0 %v67
    %252 = vmatprep.subr.mxu0 %v78
    %253 = vmatpush1.msra.mxu0 %v77
    %254 = vmatprep.subr.mxu0 %v88
    %255 = vmatpush1.msra.mxu0 %v87
    %256 = vmatprep.subr.mxu0 0.0
    %257 = vmatpush1.msra.mxu0 0.0
    %258 = vmatprep.subr.mxu0 0.0
    %259 = vmatpush1.msra.mxu0 0.0
    %260 = vmatprep.subr.mxu0 0.0
    %261 = vmatpush1.msra.mxu0 0.0
    %262 = vmatprep.subr.mxu0 0.0
    %263 = vmatpush1.msra.mxu0 0.0
    %264 = vmatprep.subr.mxu0 0.0
    %265 = vmatpush1.msra.mxu0 0.0
    %266 = vmatprep.subr.mxu0 0.0
    %267 = vmatpush1.msra.mxu0 0.0
    %268 = vmatprep.subr.mxu0 0.0
    %269 = vmatpush1.msra.mxu0 0.0
    %270 = vmatprep.subr.mxu0 0.0
    %271 = vmatpush1.msra.mxu0 0.0
    %272 = vmatprep.subr.mxu0 0.0
    %273 = vmatpush1.msra.mxu0 0.0
    %274 = vmatprep.subr.mxu0 0.0
    %275 = vmatpush1.msra.mxu0 0.0
    %276 = vmatprep.subr.mxu0 0.0
    %277 = vmatpush1.msra.mxu0 0.0
    %278 = vmatprep.subr.mxu0 0.0
    %279 = vmatpush1.msra.mxu0 0.0
    %280 = vmatprep.subr.mxu0 0.0
    %281 = vmatpush1.msra.mxu0 0.0
    %282 = vmatprep.subr.mxu0 0.0
    %283 = vmatpush1.msra.mxu0 0.0
    %284 = vmatprep.subr.mxu0 0.0
    %285 = vmatpush1.msra.mxu0 0.0
    %286 = vmatprep.subr.mxu0 0.0
    %287 = vmatpush1.msra.mxu0 0.0
    %288 = vmatprep.subr.mxu0 0.0
    %289 = vmatpush1.msra.mxu0 0.0
    %290 = vmatprep.subr.mxu0 0.0
    %291 = vmatpush1.msra.mxu0 0.0
    %292 = vmatprep.subr.mxu0 0.0
    %293 = vmatpush1.msra.mxu0 0.0
    %294 = vmatprep.subr.mxu0 0.0
    %295 = vmatpush1.msra.mxu0 0.0
    %296 = vmatprep.subr.mxu0 0.0
    %297 = vmatpush1.msra.mxu0 0.0
    %298 = vmatprep.subr.mxu0 0.0
    %299 = vmatpush1.msra.mxu0 0.0
    %300 = vmatprep.subr.mxu0 0.0
    %301 = vmatpush1.msra.mxu0 0.0
    %302 = vmatprep.subr.mxu0 0.0
    %303 = vmatpush1.msra.mxu0 0.0
    %304 = vmatprep.subr.mxu0 0.0
    %305 = vmatpush1.msra.mxu0 0.0
    %306 = vmatprep.subr.mxu0 0.0
    %307 = vmatpush1.msra.mxu0 0.0
    %308 = vmatprep.subr.mxu0 0.0
    %309 = vmatpush1.msra.mxu0 0.0
    %310 = vmatprep.subr.mxu0 0.0
    %311 = vmatpush1.msra.mxu0 0.0
    %312 = vmatprep.subr.mxu0 0.0
    %313 = vmatpush1.msra.mxu0 0.0
    %314 = vmatprep.mubr.f32.mxu0 0.0
    %315 = vmatmul.mubr.f32.gmra.mrb[0].mxu0 %v95
    %v316 = vpop.f32.mrb[0].mxu0
    %v317 = vadd.f32 0.0, %v316
    %v318 = vpop.f32.mrb[0].mxu0
    %v319 = vadd.f32 0.0, %v318
    %320 = vmatprep.mubr.f32.mxu0 0.0
    %321 = vmatmul.mubr.f32.gmra.mrb[0].mxu0 %v98
    %v322 = vpop.f32.mrb[0].mxu0
    %v323 = vpop.f32.mrb[0].mxu0
    %324 = vdwg.mxu0
    %325 = vmatprep.subr.mxu0 %v70
    %326 = vmatpush1.msra.mxu0 %v69
    %327 = vmatprep.subr.mxu0 %v80
    %328 = vmatpush1.msra.mxu0 %v79
    %329 = vmatprep.subr.mxu0 %v90
    %330 = vmatpush1.msra.mxu0 %v89
    %331 = vmatprep.subr.mxu0 0.0
    %332 = vmatpush1.msra.mxu0 0.0
    %333 = vmatprep.subr.mxu0 0.0
    %334 = vmatpush1.msra.mxu0 0.0
    %335 = vmatprep.subr.mxu0 0.0
    %336 = vmatpush1.msra.mxu0 0.0
    %337 = vmatprep.subr.mxu0 0.0
    %338 = vmatpush1.msra.mxu0 0.0
    %339 = vmatprep.subr.mxu0 0.0
    %340 = vmatpush1.msra.mxu0 0.0
    %341 = vmatprep.subr.mxu0 0.0
    %342 = vmatpush1.msra.mxu0 0.0
    %343 = vmatprep.subr.mxu0 0.0
    %344 = vmatpush1.msra.mxu0 0.0
    %345 = vmatprep.subr.mxu0 0.0
    %346 = vmatpush1.msra.mxu0 0.0
    %347 = vmatprep.subr.mxu0 0.0
    %348 = vmatpush1.msra.mxu0 0.0
    %349 = vmatprep.subr.mxu0 0.0
    %350 = vmatpush1.msra.mxu0 0.0
    %351 = vmatprep.subr.mxu0 0.0
    %352 = vmatpush1.msra.mxu0 0.0
    %353 = vmatprep.subr.mxu0 0.0
    %354 = vmatpush1.msra.mxu0 0.0
    %355 = vmatprep.subr.mxu0 0.0
    %356 = vmatpush1.msra.mxu0 0.0
    %357 = vmatprep.subr.mxu0 0.0
    %358 = vmatpush1.msra.mxu0 0.0
    %359 = vmatprep.subr.mxu0 0.0
    %360 = vmatpush1.msra.mxu0 0.0
    %361 = vmatprep.subr.mxu0 0.0
    %362 = vmatpush1.msra.mxu0 0.0
    %363 = vmatprep.subr.mxu0 0.0
    %364 = vmatpush1.msra.mxu0 0.0
    %365 = vmatprep.subr.mxu0 0.0
    %366 = vmatpush1.msra.mxu0 0.0
    %367 = vmatprep.subr.mxu0 0.0
    %368 = vmatpush1.msra.mxu0 0.0
    %369 = vmatprep.subr.mxu0 0.0
    %370 = vmatpush1.msra.mxu0 0.0
    %371 = vmatprep.subr.mxu0 0.0
    %372 = vmatpush1.msra.mxu0 0.0
    %373 = vmatprep.subr.mxu0 0.0
    %374 = vmatpush1.msra.mxu0 0.0
    %375 = vmatprep.subr.mxu0 0.0
    %376 = vmatpush1.msra.mxu0 0.0
    %377 = vmatprep.subr.mxu0 0.0
    %378 = vmatpush1.msra.mxu0 0.0
    %379 = vmatprep.subr.mxu0 0.0
    %380 = vmatpush1.msra.mxu0 0.0
    %381 = vmatprep.subr.mxu0 0.0
    %382 = vmatpush1.msra.mxu0 0.0
    %383 = vmatprep.subr.mxu0 0.0
    %384 = vmatpush1.msra.mxu0 0.0
    %385 = vmatprep.subr.mxu0 0.0
    %386 = vmatpush1.msra.mxu0 0.0
    %387 = vmatprep.subr.mxu0 0.0
    %388 = vmatpush1.msra.mxu0 0.0
    %389 = vmatprep.mubr.f32.mxu0 0.0
    %390 = vmatmul.mubr.f32.gmra.mrb[0].mxu0 %v95
    %v391 = vpop.f32.mrb[0].mxu0
    %v392 = vpop.f32.mrb[0].mxu0
    %393 = vmatprep.mubr.f32.mxu0 0.0
    %394 = vmatmul.mubr.f32.gmra.mrb[0].mxu0 %v98
    %v395 = vpop.f32.mrb[0].mxu0
    %v396 = vadd.f32 0.0, %v395
    %v397 = vpop.f32.mrb[0].mxu0
    %v398 = vadd.f32 0.0, %v397
    %399 = vdwg.mxu0
    %400 = vmatprep.subr.mxu0 %v72
    %401 = vmatpush1.msra.mxu0 %v71
    %402 = vmatprep.subr.mxu0 %v82
    %403 = vmatpush1.msra.mxu0 %v81
    %404 = vmatprep.subr.mxu0 %v92
    %405 = vmatpush1.msra.mxu0 %v91
    %406 = vmatprep.subr.mxu0 0.0
    %407 = vmatpush1.msra.mxu0 0.0
    %408 = vmatprep.subr.mxu0 0.0
    %409 = vmatpush1.msra.mxu0 0.0
    %410 = vmatprep.subr.mxu0 0.0
    %411 = vmatpush1.msra.mxu0 0.0
    %412 = vmatprep.subr.mxu0 0.0
    %413 = vmatpush1.msra.mxu0 0.0
    %414 = vmatprep.subr.mxu0 0.0
    %415 = vmatpush1.msra.mxu0 0.0
    %416 = vmatprep.subr.mxu0 0.0
    %417 = vmatpush1.msra.mxu0 0.0
    %418 = vmatprep.subr.mxu0 0.0
    %419 = vmatpush1.msra.mxu0 0.0
    %420 = vmatprep.subr.mxu0 0.0
    %421 = vmatpush1.msra.mxu0 0.0
    %422 = vmatprep.subr.mxu0 0.0
    %423 = vmatpush1.msra.mxu0 0.0
    %424 = vmatprep.subr.mxu0 0.0
    %425 = vmatpush1.msra.mxu0 0.0
    %426 = vmatprep.subr.mxu0 0.0
    %427 = vmatpush1.msra.mxu0 0.0
    %428 = vmatprep.subr.mxu0 0.0
    %429 = vmatpush1.msra.mxu0 0.0
    %430 = vmatprep.subr.mxu0 0.0
    %431 = vmatpush1.msra.mxu0 0.0
    %432 = vmatprep.subr.mxu0 0.0
    %433 = vmatpush1.msra.mxu0 0.0
    %434 = vmatprep.subr.mxu0 0.0
    %435 = vmatpush1.msra.mxu0 0.0
    %436 = vmatprep.subr.mxu0 0.0
    %437 = vmatpush1.msra.mxu0 0.0
    %438 = vmatprep.subr.mxu0 0.0
    %439 = vmatpush1.msra.mxu0 0.0
    %440 = vmatprep.subr.mxu0 0.0
    %441 = vmatpush1.msra.mxu0 0.0
    %442 = vmatprep.subr.mxu0 0.0
    %443 = vmatpush1.msra.mxu0 0.0
    %444 = vmatprep.subr.mxu0 0.0
    %445 = vmatpush1.msra.mxu0 0.0
    %446 = vmatprep.subr.mxu0 0.0
    %447 = vmatpush1.msra.mxu0 0.0
    %448 = vmatprep.subr.mxu0 0.0
    %449 = vmatpush1.msra.mxu0 0.0
    %450 = vmatprep.subr.mxu0 0.0
    %451 = vmatpush1.msra.mxu0 0.0
    %452 = vmatprep.subr.mxu0 0.0
    %453 = vmatpush1.msra.mxu0 0.0
    %454 = vmatprep.subr.mxu0 0.0
    %455 = vmatpush1.msra.mxu0 0.0
    %456 = vmatprep.subr.mxu0 0.0
    %457 = vmatpush1.msra.mxu0 0.0
    %458 = vmatprep.subr.mxu0 0.0
    %459 = vmatpush1.msra.mxu0 0.0
    %460 = vmatprep.subr.mxu0 0.0
    %461 = vmatpush1.msra.mxu0 0.0
    %462 = vmatprep.subr.mxu0 0.0
    %463 = vmatpush1.msra.mxu0 0.0
    %464 = vmatprep.mubr.f32.mxu0 0.0
    %465 = vmatmul.mubr.f32.gmra.mrb[0].mxu0 %v95
    %v466 = vpop.f32.mrb[0].mxu0
    %v467 = vpop.f32.mrb[0].mxu0
    %468 = vmatprep.mubr.f32.mxu0 0.0
    %469 = vmatmul.mubr.f32.gmra.mrb[0].mxu0 %v98
    %v470 = vpop.f32.mrb[0].mxu0
    %v471 = vadd.f32 0.0, %v470
    %v472 = vpop.f32.mrb[0].mxu0
    %v473 = vadd.f32 0.0, %v472
    %474 = vdwg.mxu0
    %vm475 = vcmp.gt.f32.partialorder %v167, 0.0
    %vm476 = vcmp.gt.f32.partialorder %v169, 0.0
    %v477 = vsel %vm475, %v473, %v471
    %v478 = vsel %vm475, %v398, %v396
    %v479 = vsel %vm476, %v477, %v478
    %v480 = vmax.f32 %v479, -4.59512
    %v481 = vmin.f32 %v480, 4.59512
    %v482 = vld [vmem:[#allocation4 + $0xf0] sm:$0xff]
    %v483 = vld [vmem:[#allocation4 + $0xf8] sm:$0xff]
    %v484 = vld [vmem:[#allocation4 + $0x100] sm:$0xff]
    %v485 = vld [vmem:[#allocation4 + $0x108] sm:$0xff]
    %v486 = vld [vmem:[#allocation4 + $0x140] sm:$0xff]
    %v487 = vld [vmem:[#allocation4 + $0x148] sm:$0xff]
    %v488 = vld [vmem:[#allocation4 + $0x150] sm:$0xff]
    %v489 = vld [vmem:[#allocation4 + $0x158] sm:$0xff]
    %v490 = vld [vmem:[#allocation4 + $0x190] sm:$0xff]
    %v491 = vld [vmem:[#allocation4 + $0x198] sm:$0xff]
    %v492 = vld [vmem:[#allocation4 + $0x1a0] sm:$0xff]
    %v493 = vld [vmem:[#allocation4 + $0x1a8] sm:$0xff]
    %v494 = vld [vmem:[#allocation4 + $0x1e0] sm:$0xff]
    %v495 = vld [vmem:[#allocation4 + $0x1e8] sm:$0xff]
    %v496 = vld [vmem:[#allocation4 + $0x1f0] sm:$0xff]
    %v497 = vld [vmem:[#allocation4 + $0x1f8] sm:$0xff]
    %v498 = vld [vmem:[#allocation4 + $0x230] sm:$0xff]
    %v499 = vld [vmem:[#allocation4 + $0x238] sm:$0xff]
    %v500 = vld [vmem:[#allocation4 + $0x240] sm:$0xff]
    %v501 = vld [vmem:[#allocation4 + $0x248] sm:$0xff]
    %v502 = vld [vmem:[#allocation4 + $0x280] sm:$0xff]
    %v503 = vld [vmem:[#allocation4 + $0x288] sm:$0xff]
    %v504 = vld [vmem:[#allocation4 + $0x290] sm:$0xff]
    %v505 = vld [vmem:[#allocation4 + $0x298] sm:$0xff]
    %v506 = vld [vmem:[#allocation4 + $0x2d0] sm:$0xff]
    %v507 = vld [vmem:[#allocation4 + $0x2d8] sm:$0xff]
    %v508 = vld [vmem:[#allocation4 + $0x2e0] sm:$0xff]
    %v509 = vld [vmem:[#allocation4 + $0x2e8] sm:$0xff]
    %v510 = vld [vmem:[#allocation4 + $0x320] sm:$0xff]
    %v511 = vld [vmem:[#allocation4 + $0x328] sm:$0xff]
    %v512 = vld [vmem:[#allocation4 + $0x330] sm:$0xff]
    %v513 = vld [vmem:[#allocation4 + $0x338] sm:$0xff]
    %v514 = vld [vmem:[#allocation4 + $0x370] sm:$0xff]
    %v515 = vld [vmem:[#allocation4 + $0x378] sm:$0xff]
    %v516 = vld [vmem:[#allocation4 + $0x380] sm:$0xff]
    %v517 = vld [vmem:[#allocation4 + $0x388] sm:$0xff]
    %v518 = vld [vmem:[#allocation4 + $0x3c0] sm:$0xff]
    %v519 = vld [vmem:[#allocation4 + $0x3c8] sm:$0xff]
    %v520 = vld [vmem:[#allocation4 + $0x3d0] sm:$0xff]
    %v521 = vld [vmem:[#allocation4 + $0x3d8] sm:$0xff]
    %v522 = vld [vmem:[#allocation4 + $0x410] sm:$0xff]
    %v523 = vld [vmem:[#allocation4 + $0x418] sm:$0xff]
    %v524 = vld [vmem:[#allocation4 + $0x420] sm:$0xff]
    %v525 = vld [vmem:[#allocation4 + $0x428] sm:$0xff]
    %v526 = vld [vmem:[#allocation4 + $0x460] sm:$0xff]
    %v527 = vld [vmem:[#allocation4 + $0x468] sm:$0xff]
    %v528 = vld [vmem:[#allocation4 + $0x470] sm:$0xff]
    %v529 = vld [vmem:[#allocation4 + $0x478] sm:$0xff]
    %v530 = vld [vmem:[#allocation4 + $0x4b0] sm:$0xff]
    %v531 = vld [vmem:[#allocation4 + $0x4b8] sm:$0xff]
    %v532 = vld [vmem:[#allocation4 + $0x4c0] sm:$0xff]
    %v533 = vld [vmem:[#allocation4 + $0x4c8] sm:$0xff]
    %v534 = vld [vmem:[#allocation4 + $0x500] sm:$0xff]
    %v535 = vld [vmem:[#allocation4 + $0x508] sm:$0xff]
    %v536 = vld [vmem:[#allocation4 + $0x510] sm:$0xff]
    %v537 = vld [vmem:[#allocation4 + $0x518] sm:$0xff]
    %v538 = vld [vmem:[#allocation4 + $0x550] sm:$0xff]
    %v539 = vld [vmem:[#allocation4 + $0x558] sm:$0xff]
    %v540 = vld [vmem:[#allocation4 + $0x560] sm:$0xff]
    %v541 = vld [vmem:[#allocation4 + $0x568] sm:$0xff]
    %v542 = vld [vmem:[#allocation4 + $0x5a0] sm:$0xff]
    %v543 = vld [vmem:[#allocation4 + $0x5a8] sm:$0xff]
    %v544 = vld [vmem:[#allocation4 + $0x5b0] sm:$0xff]
    %v545 = vld [vmem:[#allocation4 + $0x5b8] sm:$0xff]
    %546 = vmatprep.subr.mxu0 %v483
    %547 = vmatpush1.msra.mxu0 %v482
    %548 = vmatprep.subr.mxu0 %v487
    %549 = vmatpush1.msra.mxu0 %v486
    %550 = vmatprep.subr.mxu0 %v491
    %551 = vmatpush1.msra.mxu0 %v490
    %552 = vmatprep.subr.mxu0 %v495
    %553 = vmatpush1.msra.mxu0 %v494
    %554 = vmatprep.subr.mxu0 %v499
    %555 = vmatpush1.msra.mxu0 %v498
    %556 = vmatprep.subr.mxu0 %v503
    %557 = vmatpush1.msra.mxu0 %v502
    %558 = vmatprep.subr.mxu0 %v507
    %559 = vmatpush1.msra.mxu0 %v506
    %560 = vmatprep.subr.mxu0 %v511
    %561 = vmatpush1.msra.mxu0 %v510
    %562 = vmatprep.subr.mxu0 %v515
    %563 = vmatpush1.msra.mxu0 %v514
    %564 = vmatprep.subr.mxu0 %v519
    %565 = vmatpush1.msra.mxu0 %v518
    %566 = vmatprep.subr.mxu0 %v523
    %567 = vmatpush1.msra.mxu0 %v522
    %568 = vmatprep.subr.mxu0 %v527
    %569 = vmatpush1.msra.mxu0 %v526
    %570 = vmatprep.subr.mxu0 %v531
    %571 = vmatpush1.msra.mxu0 %v530
    %572 = vmatprep.subr.mxu0 %v535
    %573 = vmatpush1.msra.mxu0 %v534
    %574 = vmatprep.subr.mxu0 %v539
    %575 = vmatpush1.msra.mxu0 %v538
    %576 = vmatprep.subr.mxu0 %v543
    %577 = vmatpush1.msra.mxu0 %v542
    %578 = vmatprep.subr.mxu0 0.0
    %579 = vmatpush1.msra.mxu0 0.0
    %580 = vmatprep.subr.mxu0 0.0
    %581 = vmatpush1.msra.mxu0 0.0
    %582 = vmatprep.subr.mxu0 0.0
    %583 = vmatpush1.msra.mxu0 0.0
    %584 = vmatprep.subr.mxu0 0.0
    %585 = vmatpush1.msra.mxu0 0.0
    %586 = vmatprep.subr.mxu0 0.0
    %587 = vmatpush1.msra.mxu0 0.0
    %588 = vmatprep.subr.mxu0 0.0
    %589 = vmatpush1.msra.mxu0 0.0
    %590 = vmatprep.subr.mxu0 0.0
    %591 = vmatpush1.msra.mxu0 0.0
    %592 = vmatprep.subr.mxu0 0.0
    %593 = vmatpush1.msra.mxu0 0.0
    %594 = vmatprep.subr.mxu0 0.0
    %595 = vmatpush1.msra.mxu0 0.0
    %596 = vmatprep.subr.mxu0 0.0
    %597 = vmatpush1.msra.mxu0 0.0
    %598 = vmatprep.subr.mxu0 0.0
    %599 = vmatpush1.msra.mxu0 0.0
    %600 = vmatprep.subr.mxu0 0.0
    %601 = vmatpush1.msra.mxu0 0.0
    %602 = vmatprep.subr.mxu0 0.0
    %603 = vmatpush1.msra.mxu0 0.0
    %604 = vmatprep.subr.mxu0 0.0
    %605 = vmatpush1.msra.mxu0 0.0
    %606 = vmatprep.subr.mxu0 0.0
    %607 = vmatpush1.msra.mxu0 0.0
    %608 = vmatprep.subr.mxu0 0.0
    %609 = vmatpush1.msra.mxu0 0.0
    %610 = vmatprep.mubr.f32.mxu0 0.0
    %611 = vmatmul.mubr.f32.gmra.mrb[0].mxu0 %v481
    %v612 = vpop.f32.mrb[0].mxu0
    %v613 = vadd.f32 0.0, %v612
    %v614 = vpop.f32.mrb[0].mxu0
    %v615 = vadd.f32 0.0, %v614
    %616 = vdwg.mxu0
    %617 = vmatprep.subr.mxu0 %v485
    %618 = vmatpush1.msra.mxu0 %v484
    %619 = vmatprep.subr.mxu0 %v489
    %620 = vmatpush1.msra.mxu0 %v488
    %621 = vmatprep.subr.mxu0 %v493
    %622 = vmatpush1.msra.mxu0 %v492
    %623 = vmatprep.subr.mxu0 %v497
    %624 = vmatpush1.msra.mxu0 %v496
    %625 = vmatprep.subr.mxu0 %v501
    %626 = vmatpush1.msra.mxu0 %v500
    %627 = vmatprep.subr.mxu0 %v505
    %628 = vmatpush1.msra.mxu0 %v504
    %629 = vmatprep.subr.mxu0 %v509
    %630 = vmatpush1.msra.mxu0 %v508
    %631 = vmatprep.subr.mxu0 %v513
    %632 = vmatpush1.msra.mxu0 %v512
    %633 = vmatprep.subr.mxu0 %v517
    %634 = vmatpush1.msra.mxu0 %v516
    %635 = vmatprep.subr.mxu0 %v521
    %636 = vmatpush1.msra.mxu0 %v520
    %637 = vmatprep.subr.mxu0 %v525
    %638 = vmatpush1.msra.mxu0 %v524
    %639 = vmatprep.subr.mxu0 %v529
    %640 = vmatpush1.msra.mxu0 %v528
    %641 = vmatprep.subr.mxu0 %v533
    %642 = vmatpush1.msra.mxu0 %v532
    %643 = vmatprep.subr.mxu0 %v537
    %644 = vmatpush1.msra.mxu0 %v536
    %645 = vmatprep.subr.mxu0 %v541
    %646 = vmatpush1.msra.mxu0 %v540
    %647 = vmatprep.subr.mxu0 %v545
    %648 = vmatpush1.msra.mxu0 %v544
    %649 = vmatprep.subr.mxu0 0.0
    %650 = vmatpush1.msra.mxu0 0.0
    %651 = vmatprep.subr.mxu0 0.0
    %652 = vmatpush1.msra.mxu0 0.0
    %653 = vmatprep.subr.mxu0 0.0
    %654 = vmatpush1.msra.mxu0 0.0
    %655 = vmatprep.subr.mxu0 0.0
    %656 = vmatpush1.msra.mxu0 0.0
    %657 = vmatprep.subr.mxu0 0.0
    %658 = vmatpush1.msra.mxu0 0.0
    %659 = vmatprep.subr.mxu0 0.0
    %660 = vmatpush1.msra.mxu0 0.0
    %661 = vmatprep.subr.mxu0 0.0
    %662 = vmatpush1.msra.mxu0 0.0
    %663 = vmatprep.subr.mxu0 0.0
    %664 = vmatpush1.msra.mxu0 0.0
    %665 = vmatprep.subr.mxu0 0.0
    %666 = vmatpush1.msra.mxu0 0.0
    %667 = vmatprep.subr.mxu0 0.0
    %668 = vmatpush1.msra.mxu0 0.0
    %669 = vmatprep.subr.mxu0 0.0
    %670 = vmatpush1.msra.mxu0 0.0
    %671 = vmatprep.subr.mxu0 0.0
    %672 = vmatpush1.msra.mxu0 0.0
    %673 = vmatprep.subr.mxu0 0.0
    %674 = vmatpush1.msra.mxu0 0.0
    %675 = vmatprep.subr.mxu0 0.0
    %676 = vmatpush1.msra.mxu0 0.0
    %677 = vmatprep.subr.mxu0 0.0
    %678 = vmatpush1.msra.mxu0 0.0
    %679 = vmatprep.subr.mxu0 0.0
    %680 = vmatpush1.msra.mxu0 0.0
    %681 = vmatprep.mubr.f32.mxu0 0.0
    %682 = vmatmul.mubr.f32.gmra.mrb[0].mxu0 %v481
    %v683 = vpop.f32.mrb[0].mxu0
    %v684 = vadd.f32 0.0, %v683
    %v685 = vpop.f32.mrb[0].mxu0
    %v686 = vadd.f32 0.0, %v685
    %687 = vdwg.mxu0
    %vm688 = vcmp.gt.f32.partialorder %v242, 0.0
    %vm689 = vcmp.gt.f32.partialorder %v244, 0.0
    %v690 = vsel %vm688, %v686, %v684
    %v691 = vsel %vm688, %v615, %v613
    %v692 = vsel %vm689, %v690, %v691
    %v693 = vmax.f32 %v692, -4.59512
    %v694 = vmin.f32 %v693, 4.59512
    %v695 = vld [vmem:[#allocation4 + $0x110] sm:$0xff]
    %v696 = vld [vmem:[#allocation4 + $0x118] sm:$0xff]
    %v697 = vld [vmem:[#allocation4 + $0x120] sm:$0xff]
    %v698 = vld [vmem:[#allocation4 + $0x128] sm:$0xff]
    %v699 = vld [vmem:[#allocation4 + $0x160] sm:$0xff]
    %v700 = vld [vmem:[#allocation4 + $0x168] sm:$0xff]
    %v701 = vld [vmem:[#allocation4 + $0x170] sm:$0xff]
    %v702 = vld [vmem:[#allocation4 + $0x178] sm:$0xff]
    %v703 = vld [vmem:[#allocation4 + $0x1b0] sm:$0xff]
    %v704 = vld [vmem:[#allocation4 + $0x1b8] sm:$0xff]
    %v705 = vld [vmem:[#allocation4 + $0x1c0] sm:$0xff]
    %v706 = vld [vmem:[#allocation4 + $0x1c8] sm:$0xff]
    %v707 = vld [vmem:[#allocation4 + $0x200] sm:$0xff]
    %v708 = vld [vmem:[#allocation4 + $0x208] sm:$0xff]
    %v709 = vld [vmem:[#allocation4 + $0x210] sm:$0xff]
    %v710 = vld [vmem:[#allocation4 + $0x218] sm:$0xff]
    %v711 = vld [vmem:[#allocation4 + $0x250] sm:$0xff]
    %v712 = vld [vmem:[#allocation4 + $0x258] sm:$0xff]
    %v713 = vld [vmem:[#allocation4 + $0x260] sm:$0xff]
    %v714 = vld [vmem:[#allocation4 + $0x268] sm:$0xff]
    %v715 = vld [vmem:[#allocation4 + $0x2a0] sm:$0xff]
    %v716 = vld [vmem:[#allocation4 + $0x2a8] sm:$0xff]
    %v717 = vld [vmem:[#allocation4 + $0x2b0] sm:$0xff]
    %v718 = vld [vmem:[#allocation4 + $0x2b8] sm:$0xff]
    %v719 = vld [vmem:[#allocation4 + $0x2f0] sm:$0xff]
    %v720 = vld [vmem:[#allocation4 + $0x2f8] sm:$0xff]
    %v721 = vld [vmem:[#allocation4 + $0x300] sm:$0xff]
    %v722 = vld [vmem:[#allocation4 + $0x308] sm:$0xff]
    %v723 = vld [vmem:[#allocation4 + $0x340] sm:$0xff]
    %v724 = vld [vmem:[#allocation4 + $0x348] sm:$0xff]
    %v725 = vld [vmem:[#allocation4 + $0x350] sm:$0xff]
    %v726 = vld [vmem:[#allocation4 + $0x358] sm:$0xff]
    %v727 = vld [vmem:[#allocation4 + $0x390] sm:$0xff]
    %v728 = vld [vmem:[#allocation4 + $0x398] sm:$0xff]
    %v729 = vld [vmem:[#allocation4 + $0x3a0] sm:$0xff]
    %v730 = vld [vmem:[#allocation4 + $0x3a8] sm:$0xff]
    %v731 = vld [vmem:[#allocation4 + $0x3e0] sm:$0xff]
    %v732 = vld [vmem:[#allocation4 + $0x3e8] sm:$0xff]
    %v733 = vld [vmem:[#allocation4 + $0x3f0] sm:$0xff]
    %v734 = vld [vmem:[#allocation4 + $0x3f8] sm:$0xff]
    %v735 = vld [vmem:[#allocation4 + $0x430] sm:$0xff]
    %v736 = vld [vmem:[#allocation4 + $0x438] sm:$0xff]
    %v737 = vld [vmem:[#allocation4 + $0x440] sm:$0xff]
    %v738 = vld [vmem:[#allocation4 + $0x448] sm:$0xff]
    %v739 = vld [vmem:[#allocation4 + $0x480] sm:$0xff]
    %v740 = vld [vmem:[#allocation4 + $0x488] sm:$0xff]
    %v741 = vld [vmem:[#allocation4 + $0x490] sm:$0xff]
    %v742 = vld [vmem:[#allocation4 + $0x498] sm:$0xff]
    %v743 = vld [vmem:[#allocation4 + $0x4d0] sm:$0xff]
    %v744 = vld [vmem:[#allocation4 + $0x4d8] sm:$0xff]
    %v745 = vld [vmem:[#allocation4 + $0x4e0] sm:$0xff]
    %v746 = vld [vmem:[#allocation4 + $0x4e8] sm:$0xff]
    %v747 = vld [vmem:[#allocation4 + $0x520] sm:$0xff]
    %v748 = vld [vmem:[#allocation4 + $0x528] sm:$0xff]
    %v749 = vld [vmem:[#allocation4 + $0x530] sm:$0xff]
    %v750 = vld [vmem:[#allocation4 + $0x538] sm:$0xff]
    %v751 = vld [vmem:[#allocation4 + $0x570] sm:$0xff]
    %v752 = vld [vmem:[#allocation4 + $0x578] sm:$0xff]
    %v753 = vld [vmem:[#allocation4 + $0x580] sm:$0xff]
    %v754 = vld [vmem:[#allocation4 + $0x588] sm:$0xff]
    %v755 = vld [vmem:[#allocation4 + $0x5c0] sm:$0xff]
    %v756 = vld [vmem:[#allocation4 + $0x5c8] sm:$0xff]
    %v757 = vld [vmem:[#allocation4 + $0x5d0] sm:$0xff]
    %v758 = vld [vmem:[#allocation4 + $0x5d8] sm:$0xff]
    %759 = vmatprep.subr.mxu0 %v696
    %760 = vmatpush1.msra.mxu0 %v695
    %761 = vmatprep.subr.mxu0 %v700
    %762 = vmatpush1.msra.mxu0 %v699
    %763 = vmatprep.subr.mxu0 %v704
    %764 = vmatpush1.msra.mxu0 %v703
    %765 = vmatprep.subr.mxu0 %v708
    %766 = vmatpush1.msra.mxu0 %v707
    %767 = vmatprep.subr.mxu0 %v712
    %768 = vmatpush1.msra.mxu0 %v711
    %769 = vmatprep.subr.mxu0 %v716
    %770 = vmatpush1.msra.mxu0 %v715
    %771 = vmatprep.subr.mxu0 %v720
    %772 = vmatpush1.msra.mxu0 %v719
    %773 = vmatprep.subr.mxu0 %v724
    %774 = vmatpush1.msra.mxu0 %v723
    %775 = vmatprep.subr.mxu0 %v728
    %776 = vmatpush1.msra.mxu0 %v727
    %777 = vmatprep.subr.mxu0 %v732
    %778 = vmatpush1.msra.mxu0 %v731
    %779 = vmatprep.subr.mxu0 %v736
    %780 = vmatpush1.msra.mxu0 %v735
    %781 = vmatprep.subr.mxu0 %v740
    %782 = vmatpush1.msra.mxu0 %v739
    %783 = vmatprep.subr.mxu0 %v744
    %784 = vmatpush1.msra.mxu0 %v743
    %785 = vmatprep.subr.mxu0 %v748
    %786 = vmatpush1.msra.mxu0 %v747
    %787 = vmatprep.subr.mxu0 %v752
    %788 = vmatpush1.msra.mxu0 %v751
    %789 = vmatprep.subr.mxu0 %v756
    %790 = vmatpush1.msra.mxu0 %v755
    %791 = vmatprep.subr.mxu0 0.0
    %792 = vmatpush1.msra.mxu0 0.0
    %793 = vmatprep.subr.mxu0 0.0
    %794 = vmatpush1.msra.mxu0 0.0
    %795 = vmatprep.subr.mxu0 0.0
    %796 = vmatpush1.msra.mxu0 0.0
    %797 = vmatprep.subr.mxu0 0.0
    %798 = vmatpush1.msra.mxu0 0.0
    %799 = vmatprep.subr.mxu0 0.0
    %800 = vmatpush1.msra.mxu0 0.0
    %801 = vmatprep.subr.mxu0 0.0
    %802 = vmatpush1.msra.mxu0 0.0
    %803 = vmatprep.subr.mxu0 0.0
    %804 = vmatpush1.msra.mxu0 0.0
    %805 = vmatprep.subr.mxu0 0.0
    %806 = vmatpush1.msra.mxu0 0.0
    %807 = vmatprep.subr.mxu0 0.0
    %808 = vmatpush1.msra.mxu0 0.0
    %809 = vmatprep.subr.mxu0 0.0
    %810 = vmatpush1.msra.mxu0 0.0
    %811 = vmatprep.subr.mxu0 0.0
    %812 = vmatpush1.msra.mxu0 0.0
    %813 = vmatprep.subr.mxu0 0.0
    %814 = vmatpush1.msra.mxu0 0.0
    %815 = vmatprep.subr.mxu0 0.0
    %816 = vmatpush1.msra.mxu0 0.0
    %817 = vmatprep.subr.mxu0 0.0
    %818 = vmatpush1.msra.mxu0 0.0
    %819 = vmatprep.subr.mxu0 0.0
    %820 = vmatpush1.msra.mxu0 0.0
    %821 = vmatprep.subr.mxu0 0.0
    %822 = vmatpush1.msra.mxu0 0.0
    %823 = vmatprep.mubr.f32.mxu0 0.0
    %824 = vmatmul.mubr.f32.gmra.mrb[0].mxu0 %v694
    %v825 = vpop.f32.mrb[0].mxu0
    %v826 = vadd.f32 0.0, %v825
    %v827 = vpop.f32.mrb[0].mxu0
    %v828 = vadd.f32 0.0, %v827
    %829 = vdwg.mxu0
    %830 = vmatprep.subr.mxu0 %v698
    %831 = vmatpush1.msra.mxu0 %v697
    %832 = vmatprep.subr.mxu0 %v702
    %833 = vmatpush1.msra.mxu0 %v701
    %834 = vmatprep.subr.mxu0 %v706
    %835 = vmatpush1.msra.mxu0 %v705
    %836 = vmatprep.subr.mxu0 %v710
    %837 = vmatpush1.msra.mxu0 %v709
    %838 = vmatprep.subr.mxu0 %v714
    %839 = vmatpush1.msra.mxu0 %v713
    %840 = vmatprep.subr.mxu0 %v718
    %841 = vmatpush1.msra.mxu0 %v717
    %842 = vmatprep.subr.mxu0 %v722
    %843 = vmatpush1.msra.mxu0 %v721
    %844 = vmatprep.subr.mxu0 %v726
    %845 = vmatpush1.msra.mxu0 %v725
    %846 = vmatprep.subr.mxu0 %v730
    %847 = vmatpush1.msra.mxu0 %v729
    %848 = vmatprep.subr.mxu0 %v734
    %849 = vmatpush1.msra.mxu0 %v733
    %850 = vmatprep.subr.mxu0 %v738
    %851 = vmatpush1.msra.mxu0 %v737
    %852 = vmatprep.subr.mxu0 %v742
    %853 = vmatpush1.msra.mxu0 %v741
    %854 = vmatprep.subr.mxu0 %v746
    %855 = vmatpush1.msra.mxu0 %v745
    %856 = vmatprep.subr.mxu0 %v750
    %857 = vmatpush1.msra.mxu0 %v749
    %858 = vmatprep.subr.mxu0 %v754
    %859 = vmatpush1.msra.mxu0 %v753
    %860 = vmatprep.subr.mxu0 %v758
    %861 = vmatpush1.msra.mxu0 %v757
    %862 = vmatprep.subr.mxu0 0.0
    %863 = vmatpush1.msra.mxu0 0.0
    %864 = vmatprep.subr.mxu0 0.0
    %865 = vmatpush1.msra.mxu0 0.0
    %866 = vmatprep.subr.mxu0 0.0
    %867 = vmatpush1.msra.mxu0 0.0
    %868 = vmatprep.subr.mxu0 0.0
    %869 = vmatpush1.msra.mxu0 0.0
    %870 = vmatprep.subr.mxu0 0.0
    %871 = vmatpush1.msra.mxu0 0.0
    %872 = vmatprep.subr.mxu0 0.0
    %873 = vmatpush1.msra.mxu0 0.0
    %874 = vmatprep.subr.mxu0 0.0
    %875 = vmatpush1.msra.mxu0 0.0
    %876 = vmatprep.subr.mxu0 0.0
    %877 = vmatpush1.msra.mxu0 0.0
    %878 = vmatprep.subr.mxu0 0.0
    %879 = vmatpush1.msra.mxu0 0.0
    %880 = vmatprep.subr.mxu0 0.0
    %881 = vmatpush1.msra.mxu0 0.0
    %882 = vmatprep.subr.mxu0 0.0
    %883 = vmatpush1.msra.mxu0 0.0
    %884 = vmatprep.subr.mxu0 0.0
    %885 = vmatpush1.msra.mxu0 0.0
    %886 = vmatprep.subr.mxu0 0.0
    %887 = vmatpush1.msra.mxu0 0.0
    %888 = vmatprep.subr.mxu0 0.0
    %889 = vmatpush1.msra.mxu0 0.0
    %890 = vmatprep.subr.mxu0 0.0
    %891 = vmatpush1.msra.mxu0 0.0
    %892 = vmatprep.subr.mxu0 0.0
    %893 = vmatpush1.msra.mxu0 0.0
    %894 = vmatprep.mubr.f32.mxu0 0.0
    %895 = vmatmul.mubr.f32.gmra.mrb[0].mxu0 %v694
    %v896 = vpop.f32.mrb[0].mxu0
    %v897 = vadd.f32 0.0, %v896
    %v898 = vpop.f32.mrb[0].mxu0
    %v899 = vadd.f32 0.0, %v898
    %900 = vdwg.mxu0
    %vm901 = vcmp.gt.f32.partialorder %v317, 0.0
    %vm902 = vcmp.gt.f32.partialorder %v319, 0.0
    %v903 = vsel %vm901, %v899, %v897
    %v904 = vsel %vm901, %v828, %v826
    %v905 = vsel %vm902, %v903, %v904
    %v906 = vand.u32 2147483647, %v905
    %v907 = vsub.f32 0.0, %v906
    %v908 = vmul.f32 %v907, 1.442695
    %v909 = vpow.pop %v908
    %vm910 = vcmp.ge.f32.partialorder %v905, 0.0
    %v911 = vadd.f32 %v909, 1.0
    %v912 = vrcp.pop %v911
    %v913 = vmul.f32 1.0, %v912
    %v914 = vmul.f32 %v909, %v912
    %v915 = vsel %vm910, %v913, %v914
    %v916 = vmax.f32 %v915, 0.01
    %v917 = vmin.f32 %v916, 0.99
    %vm918 = vcmask 31744
    %919 = vst.msk [vmem:[%s2] sm:$0xff] %vm918, %v917
    // Predicated region
    $region18: #{one_vs_all_forward.1} parent=1 // pred_check
      _
    $region19: #{one_vs_all_forward.1} parent=1 // pred_check_branch
      %921 = sbr.rel (0) target = $region21
    $region20: #{one_vs_all_forward.1} parent=1 // pred_region
      _
    $region21: #{one_vs_all_forward.1} parent=1 // pred_fallthru
      _
    // Predicated region
    $region22: #{one_vs_all_forward.1} parent=1 // pred_check
      _
    $region23: #{one_vs_all_forward.1} parent=1 // pred_check_branch
      %923 = sbr.rel (0) target = $region25
    $region24: #{one_vs_all_forward.1} parent=1 // pred_region
      _
    $region25: #{one_vs_all_forward.1} parent=1 // pred_fallthru
      _
    %924 = vsyncpa [#allocation3], 1
    %925 = vsyncpa [#allocation5], 1

</llo_original>
